<compile_context>
chip_gen: v7x
topology: tpu7x:2x2x1
jax: 0.10.0
libtpu: 0.0.40
codegen_flags: <defaults>
</compile_context>

<pallas_src>
import jax
import jax.numpy as jnp
from jax.experimental import pallas as pl
from jax.experimental.pallas import tpu as pltpu

_LANE = 128
_SUBLANE = 8
# Scoped-VMEM budget for the pipelined buffers.  Safe on every generation:
# v5e/v6e have 128 MiB physical VMEM, v7x has 64 MiB.
_VMEM_LIMIT_BYTES = 48 * 1024 * 1024


def _round_up(n, m):
    return ((n + m - 1) // m) * m


def _linear_kernel(x_ref, wt_ref, b_ref, o_ref):
    # x_ref : (TB, F)  batch tile of activations
    # wt_ref: (F, C)   pre-transposed weight, resident across grid steps
    # b_ref : (1, C)   f32 bias, resident across grid steps
    acc = jax.lax.dot_general(
        x_ref[...], wt_ref[...],
        dimension_numbers=(((1,), (0,)), ((), ())),   # NN contraction on MXU
        preferred_element_type=jnp.float32,
    )                                                  # (TB, C) f32
    o_ref[...] = (acc + b_ref[...]).astype(o_ref.dtype)


def _pick_batch_tile(B, F, C, itemsize, max_tile):
    """Largest batch tile that fits the VMEM budget, with >=2 grid steps
    whenever the batch permits (so 'parallel' can shard across v7x's 2 TCs)."""
    # Per-row VMEM cost of the pipelined buffers: double-buffered x tile plus
    # double-buffered out tile, last dim lane-padded to 128.
    bytes_per_row = 2 * (_round_up(F, _LANE) + _round_up(C, _LANE)) * itemsize
    budget = _VMEM_LIMIT_BYTES // 2          # headroom for W^T, bias, spills
    tb = min(max_tile, budget // bytes_per_row)
    # Keep at least 2 grid iterations when B is large enough.
    tb = min(tb, _round_up(pl.cdiv(B, 2), _SUBLANE))
    tb = max(_SUBLANE, (tb // _SUBLANE) * _SUBLANE)
    return tb


def lr_forward(x, weight, bias, *, max_tile_b=8192):
    """Pallas forward for LR: nn.Linear(in_features, num_classes).

    x:      [B, F]   (f32 or bf16; bf16 halves HBM traffic, accumulation is f32)
    weight: [C, F]   (PyTorch nn.Linear convention)
    bias:   [C]
    returns [B, C] = x @ weight.T + bias   (dtype of x)
    """
    B, F = x.shape
    C, F2 = weight.shape
    assert F == F2, (F, F2)

    # Hoisted once out of the hot path (in training: once per weight update).
    w_t = weight.T.astype(x.dtype)                   # [F, C], matches x dtype
    bias2d = bias.astype(jnp.float32).reshape(1, C)  # f32 bias, no in-kernel cast

    itemsize = jnp.dtype(x.dtype).itemsize
    tb = _pick_batch_tile(B, F, C, itemsize, max_tile_b)
    grid = (pl.cdiv(B, tb),)                         # ragged last block is OK:
    # per-row-independent math; OOB reads are garbage rows whose outputs are
    # masked (never written back), so no wrapper pad/slice HBM round trips.

    return pl.pallas_call(
        _linear_kernel,
        out_shape=jax.ShapeDtypeStruct((B, C), x.dtype),
        grid=grid,
        in_specs=[
            pl.BlockSpec((tb, F), lambda i: (i, 0)),   # batch-tiled x
            pl.BlockSpec((F, C), lambda i: (0, 0)),    # resident W^T
            pl.BlockSpec((1, C), lambda i: (0, 0)),    # resident f32 bias
        ],
        out_specs=pl.BlockSpec((tb, C), lambda i: (i, 0)),
        compiler_params=pltpu.CompilerParams(
            dimension_semantics=("parallel",),         # megacore-shard batch
            vmem_limit_bytes=_VMEM_LIMIT_BYTES,
        ),
    )(x, w_t, bias2d)


if __name__ == "__main__":
    # args.dataset == 'synthetic' -> in_features = 60; pick num_classes = 10.
    key = jax.random.PRNGKey(0)
    kx, kw, kb, kx2 = jax.random.split(key, 4)

    in_features, num_classes = 60, 10
    bound = 1.0 / jnp.sqrt(jnp.float32(in_features))
    weight = jax.random.uniform(
        kw, (num_classes, in_features), dtype=jnp.float32,
        minval=-bound, maxval=bound)
    bias = jax.random.uniform(
        kb, (num_classes,), dtype=jnp.float32, minval=-bound, maxval=bound)

    # Small batch (single grid step).
    batch = 8
    x = jax.random.normal(kx, (batch, in_features), dtype=jnp.float32)
    out = jax.block_until_ready(lr_forward(x, weight, bias))
    ref = x @ weight.T + bias
    assert out.shape == (batch, num_classes)
    assert jnp.allclose(out, ref, atol=1e-5, rtol=1e-5)

    # Non-tile-aligned batch: exercises the ragged boundary block (no pad/slice).
    batch2 = 1000
    x2 = jax.random.normal(kx2, (batch2, in_features), dtype=jnp.float32)
    out2 = jax.block_until_ready(lr_forward(x2, weight, bias, max_tile_b=256))
    ref2 = x2 @ weight.T + bias
    assert out2.shape == (batch2, num_classes)
    assert jnp.allclose(out2, ref2, atol=1e-5, rtol=1e-5)

    # bf16 activation path (halves x HBM traffic; f32 accumulation + bias).
    x_bf = x2.astype(jnp.bfloat16)
    out_bf = jax.block_until_ready(lr_forward(x_bf, weight, bias))
    ref_bf = (x_bf.astype(jnp.float32) @ weight.T.astype(jnp.bfloat16)
              .astype(jnp.float32) + bias)
    assert out_bf.dtype == jnp.bfloat16
    assert jnp.allclose(out_bf.astype(jnp.float32), ref_bf, atol=2e-2, rtol=2e-2)

    print("KERNEL_OK")
</pallas_src>

<mosaic_0001>
module attributes {stable_mosaic.version = 11 : i64} {
  func.func @_linear_kernel(%arg0: i32, %arg1: memref<8x60xf32, #tpu.memory_space<vmem>>, %arg2: memref<60x10xf32, #tpu.memory_space<vmem>>, %arg3: memref<1x10xf32, #tpu.memory_space<vmem>>, %arg4: memref<8x10xf32, #tpu.memory_space<vmem>>) attributes {dimension_semantics = [#tpu.dimension_semantics<parallel>], iteration_bounds = array<i64: 1>, scalar_prefetch = 0 : i64, scratch_operands = 0 : i64, tpu.core_type = #tpu.core_type<tc>, window_params = [{transform_indices = @transform_0, window_bounds = array<i64: 8, 60>}, {pipeline_mode = #tpu.pipeline_mode<synchronous>, transform_indices = @transform_1, window_bounds = array<i64: 60, 10>}, {pipeline_mode = #tpu.pipeline_mode<synchronous>, transform_indices = @transform_2, window_bounds = array<i64: 1, 10>}, {transform_indices = @transform_3, window_bounds = array<i64: 8, 10>}]} {
    %c0 = arith.constant 0 : index
    %c0_0 = arith.constant 0 : index
    %0 = vector.load %arg1[%c0, %c0_0] : memref<8x60xf32, #tpu.memory_space<vmem>>, vector<8x60xf32>
    %c0_1 = arith.constant 0 : index
    %c0_2 = arith.constant 0 : index
    %1 = vector.load %arg2[%c0_1, %c0_2] : memref<60x10xf32, #tpu.memory_space<vmem>>, vector<60x10xf32>
    %cst = arith.constant dense<0.000000e+00> : vector<8x10xf32>
    %2 = tpu.matmul %0, %1, %cst {dimension_numbers = #tpu.dot_dimension_numbers<[1], [0], [0], [1], [0, 0, 1, 1], [], []>} : vector<8x60xf32>, vector<60x10xf32>, vector<8x10xf32> -> vector<8x10xf32>
    %c0_3 = arith.constant 0 : index
    %c0_4 = arith.constant 0 : index
    %3 = vector.load %arg3[%c0_3, %c0_4] : memref<1x10xf32, #tpu.memory_space<vmem>>, vector<1x10xf32>
    %4 = vector.broadcast %3 : vector<1x10xf32> to vector<8x10xf32>
    %5 = arith.addf %2, %4 : vector<8x10xf32>
    %c0_5 = arith.constant 0 : index
    %c0_6 = arith.constant 0 : index
    %6 = vector.load %arg4[%c0_5, %c0_6] : memref<8x10xf32, #tpu.memory_space<vmem>>, vector<8x10xf32>
    tpu.vector_store %arg4[%c0_5, %c0_6], %5 {strides = array<i32>} : memref<8x10xf32, #tpu.memory_space<vmem>>, vector<8x10xf32>,
    return
  }
  func.func @transform_0(%arg0: i32) -> (i32, i32) {
    %c0_i32 = arith.constant 0 : i32
    %c0_i32_0 = arith.constant 0 : i32
    return %arg0, %c0_i32 : i32, i32
  }
  func.func @transform_1(%arg0: i32) -> (i32, i32) {
    %c0_i32 = arith.constant 0 : i32
    %c0_i32_0 = arith.constant 0 : i32
    %c0_i32_1 = arith.constant 0 : i32
    return %c0_i32, %c0_i32_0 : i32, i32
  }
  func.func @transform_2(%arg0: i32) -> (i32, i32) {
    %c0_i32 = arith.constant 0 : i32
    %c0_i32_0 = arith.constant 0 : i32
    %c0_i32_1 = arith.constant 0 : i32
    return %c0_i32, %c0_i32_0 : i32, i32
  }
  func.func @transform_3(%arg0: i32) -> (i32, i32) {
    %c0_i32 = arith.constant 0 : i32
    %c0_i32_0 = arith.constant 0 : i32
    return %arg0, %c0_i32 : i32, i32
  }
}

</mosaic_0001>

<llo_original>
// kernel: tpu_custom_call.1
$region0: #{tpu_custom_call.1}
  #allocation0 [shape = 'u32[]', space=smem, size = 0x4, offset = 0x4, fixed_abs, tag = 'smem constant byte address 0x4 - core index']
  #allocation1 [shape = 'u32[144,128]{1,0:T(1,128)}', space=vmem, size = 0x12000, scoped, tag = 'internal scratch']
  %s0 = inlined_call_operand.vmem [shape: f32[8,60], index: 0, kind: input, shape index: {}]
  %s1 = inlined_call_operand.vmem [shape: f32[60,10], index: 1, kind: input, shape index: {}]
  %s2 = inlined_call_operand.vmem [shape: f32[1,10], index: 2, kind: input, shape index: {}]
  %s3 = inlined_call_operand.hbm [shape: f32[8,10], index: 3, kind: output, shape index: {}]
  %s4 = sld [smem:[#allocation0]]
  $region22: #{tpu_custom_call.1} parent=0
    _
  %s6 = ssub.s32 1, %s4
  %s7 = scalar_select 0, %s6, %s4
  $region1: #{tpu_custom_call.1} parent=0
    #allocation2 [shape = 'u8[4096]{0}', space=vmem, size = 0x1000, scoped, tag = 'output window, operand 0, single buffered']
    #allocation3 [shape = 's32[1]{0}', space=sflag, size = 0x4, scoped, tag = 'scoped memory for tpu_custom_call.1']
    %8 = vsyncpa [#allocation3], 0
    // Predicated region
    $region2: #{tpu_custom_call.1} parent=1 // pred_check
      _
    $region3: #{tpu_custom_call.1} parent=1 // pred_check_branch
      %10 = sbr.rel (0) target = $region5
    $region4: #{tpu_custom_call.1} parent=1 // pred_region
      _
    $region5: #{tpu_custom_call.1} parent=1 // pred_fallthru
      _
    // Predicated region
    $region6: #{tpu_custom_call.1} parent=1 // pred_check
      _
    $region7: #{tpu_custom_call.1} parent=1 // pred_check_branch
      %12 = sbr.rel (0) target = $region9
    $region8: #{tpu_custom_call.1} parent=1 // pred_region
      _
    $region9: #{tpu_custom_call.1} parent=1 // pred_fallthru
      _
    // Predicated region
    $region10: #{tpu_custom_call.1} parent=1 // pred_check
      _
    $region11: #{tpu_custom_call.1} parent=1 // pred_check_branch
      %14 = sbr.rel (0) target = $region13
    $region12: #{tpu_custom_call.1} parent=1 // pred_region
      _
    $region13: #{tpu_custom_call.1} parent=1 // pred_fallthru
      _
    %v15 = vld [vmem:[%s0] sm:$0xff]
    %v16 = vld [vmem:[%s1] sm:$0xff]
    %v17 = vld [vmem:[%s1 + $0x8] sm:$0xff]
    %v18 = vld [vmem:[%s1 + $0x10] sm:$0xff]
    %v19 = vld [vmem:[%s1 + $0x18] sm:$0xff]
    %v20 = vld [vmem:[%s1 + $0x20] sm:$0xff]
    %v21 = vld [vmem:[%s1 + $0x28] sm:$0xff]
    %v22 = vld [vmem:[%s1 + $0x30] sm:$0xff]
    %v23 = vld [vmem:[%s1 + $0x38] sm:$0xf]
    %v24 = vld [vmem:[%s2] sm:$0x1]
    %v26 = vlaneseq
    %v27 = vshrl.u32 %v26, 7
    %v28 = vsub.s32 0, %v27
    %v29 = vrot.slane %v24, %v28
    %vm31 = vcmask 490496
    %v33 = vsel %vm31, %v15, 0
    %vm35 = vcmask 1043456
    %v37 = vsel %vm35, %v23, 0
    %39 = vmatprep.subr.mxu0 0.0
    %40 = vmatpush1.msra.mxu0 %v16
    %41 = vmatprep.subr.mxu0 0.0
    %42 = vmatpush1.msra.mxu0 %v17
    %43 = vmatprep.subr.mxu0 0.0
    %44 = vmatpush1.msra.mxu0 %v18
    %45 = vmatprep.subr.mxu0 0.0
    %46 = vmatpush1.msra.mxu0 %v19
    %47 = vmatprep.subr.mxu0 0.0
    %48 = vmatpush1.msra.mxu0 %v20
    %49 = vmatprep.subr.mxu0 0.0
    %50 = vmatpush1.msra.mxu0 %v21
    %51 = vmatprep.subr.mxu0 0.0
    %52 = vmatpush1.msra.mxu0 %v22
    %53 = vmatprep.subr.mxu0 0.0
    %54 = vmatpush1.msra.mxu0 %v37
    %55 = vmatprep.subr.mxu0 0.0
    %56 = vmatpush1.msra.mxu0 0.0
    %57 = vmatprep.subr.mxu0 0.0
    %58 = vmatpush1.msra.mxu0 0.0
    %59 = vmatprep.subr.mxu0 0.0
    %60 = vmatpush1.msra.mxu0 0.0
    %61 = vmatprep.subr.mxu0 0.0
    %62 = vmatpush1.msra.mxu0 0.0
    %63 = vmatprep.subr.mxu0 0.0
    %64 = vmatpush1.msra.mxu0 0.0
    %65 = vmatprep.subr.mxu0 0.0
    %66 = vmatpush1.msra.mxu0 0.0
    %67 = vmatprep.subr.mxu0 0.0
    %68 = vmatpush1.msra.mxu0 0.0
    %69 = vmatprep.subr.mxu0 0.0
    %70 = vmatpush1.msra.mxu0 0.0
    %71 = vmatprep.subr.mxu0 0.0
    %72 = vmatpush1.msra.mxu0 0.0
    %73 = vmatprep.subr.mxu0 0.0
    %74 = vmatpush1.msra.mxu0 0.0
    %75 = vmatprep.subr.mxu0 0.0
    %76 = vmatpush1.msra.mxu0 0.0
    %77 = vmatprep.subr.mxu0 0.0
    %78 = vmatpush1.msra.mxu0 0.0
    %79 = vmatprep.subr.mxu0 0.0
    %80 = vmatpush1.msra.mxu0 0.0
    %81 = vmatprep.subr.mxu0 0.0
    %82 = vmatpush1.msra.mxu0 0.0
    %83 = vmatprep.subr.mxu0 0.0
    %84 = vmatpush1.msra.mxu0 0.0
    %85 = vmatprep.subr.mxu0 0.0
    %86 = vmatpush1.msra.mxu0 0.0
    %87 = vmatprep.subr.mxu0 0.0
    %88 = vmatpush1.msra.mxu0 0.0
    %89 = vmatprep.subr.mxu0 0.0
    %90 = vmatpush1.msra.mxu0 0.0
    %91 = vmatprep.subr.mxu0 0.0
    %92 = vmatpush1.msra.mxu0 0.0
    %93 = vmatprep.subr.mxu0 0.0
    %94 = vmatpush1.msra.mxu0 0.0
    %95 = vmatprep.subr.mxu0 0.0
    %96 = vmatpush1.msra.mxu0 0.0
    %97 = vmatprep.subr.mxu0 0.0
    %98 = vmatpush1.msra.mxu0 0.0
    %99 = vmatprep.subr.mxu0 0.0
    %100 = vmatpush1.msra.mxu0 0.0
    %101 = vmatprep.subr.mxu0 0.0
    %102 = vmatpush1.msra.mxu0 0.0
    %103 = vmatprep.mubr.f32.mxu0 0.0
    %104 = vmatmul.mubr.f32.gmra.mrb[0].mxu0 %v33
    %v105 = vpop.f32.mrb[0].mxu0
    %v106 = vadd.f32 %v29, %v105
    %v107 = vpop.f32.mrb[0].mxu0
    %108 = vdwg.mxu0
    %vm109 = vcmask 80896
    %110 = vst.msk [vmem:[#allocation2] sm:$0xff] %vm109, %v106
    // Predicated region
    $region14: #{tpu_custom_call.1} parent=1 // pred_check
      _
    $region15: #{tpu_custom_call.1} parent=1 // pred_check_branch
      %112 = sbr.rel (0) target = $region17
    $region16: #{tpu_custom_call.1} parent=1 // pred_region
      %s114 = ssub.s32 128, 128
      %115 = vsyncadd [#allocation3], %s114
      %s117 = sshll.u32 [#allocation2], 4
      %s118 = int_to_ptr.vmem [resolvable:$true] %s117
      %120 = dma.vmem_to_hbm [thread:$0]  %s118, 128, %s3, [#allocation3]
    $region17: #{tpu_custom_call.1} parent=1 // pred_fallthru
      _
    // Predicated region
    $region18: #{tpu_custom_call.1} parent=1 // pred_check
      _
    $region19: #{tpu_custom_call.1} parent=1 // pred_check_branch
      %122 = sbr.rel (0) target = $region21
    $region20: #{tpu_custom_call.1} parent=1 // pred_region
      %123 = dma.done [#allocation3], 128
    $region21: #{tpu_custom_call.1} parent=1 // pred_fallthru
      _
    %124 = vsyncpa [#allocation3], 1

</llo_original>
